<compile_context>
chip_gen: v6e
topology: v6e:2x2x1
jax: 0.10.0
libtpu: 0.0.40
codegen_flags: <defaults>
</compile_context>

<pallas_src>
import jax
import jax.numpy as jnp
from jax.experimental import pallas as pl
from jax.experimental.pallas import tpu as pltpu


def attention_kernel(x_ref, w1_ref, b1_ref, w2_ref, o_ref):
    tb, s_len, d = x_ref.shape
    h_dim = w1_ref.shape[1]

    x3 = x_ref[...]                                   # (TB, S, D)
    x2 = x3.reshape(tb * s_len, d)                    # merge leading dims (layout-cheap)

    # --- Linear(D->H) + Tanh: one (TB*S, D) @ (D, H) MXU matmul, tanh on the EUP. ---
    h2 = jnp.tanh(
        jnp.dot(x2, w1_ref[...], preferred_element_type=jnp.float32)
        + b1_ref[...]                                 # (1, H) broadcast
    )                                                 # (TB*S, H) f32

    # --- Linear(H->1): N=1 matmul would waste MXU columns; VPU mul + lane reduce.
    #     The scalar bias b2 is omitted: softmax over the sequence axis is
    #     shift-invariant, so it cancels exactly. ---
    h3 = h2.reshape(tb, s_len, h_dim)                 # (TB, S, H)
    scores = jnp.sum(h3 * w2_ref[...], axis=-1)       # (TB, S)

    # --- Softmax over the sequence axis (last dim -> lane reductions). ---
    m = jnp.max(scores, axis=-1, keepdims=True)       # (TB, 1)
    e = jnp.exp(scores - m)                           # (TB, S)
    l = jnp.sum(e, axis=-1, keepdims=True)            # (TB, 1)
    p = e * pl.reciprocal(l, approx=True)             # (TB, S), EUP vrcp

    # --- Weighted pooling on the MXU: out[b, d] = sum_s p[b, s] * x[b, s, d]. ---
    p3 = p.astype(x3.dtype).reshape(tb, 1, s_len)     # (TB, 1, S)
    out = jnp.einsum(
        "bqs,bsd->bqd", p3, x3, preferred_element_type=jnp.float32
    )                                                 # (TB, 1, D) f32
    o_ref[...] = out.reshape(tb, d).astype(o_ref.dtype)


def attention_forward(x, w1, b1, w2, b2=None, *, tb=None):
    """x: (B, S, D); w1: (D, H); b1: (1, H); w2: (H, 1); b2: (1, 1) -> (B, D).

    b2 is accepted for API parity with the PyTorch module but is not needed:
    adding a constant to every position's score does not change the softmax.
    """
    del b2  # shift-invariant under softmax over the sequence axis
    B, S, D = x.shape
    H = w1.shape[1]

    if tb is None:
        # Multiple-of-8 sublane tiles. For larger batches grow the tile so the
        # first matmul's M dim (tb*S) reaches the MXU's native height (~256),
        # while keeping >= 2 grid steps for megacore sharding on v7x and the
        # double-buffered x tile small relative to scoped VMEM.
        tb = min(B, 8)
        if B >= 16:
            target = max(8, -(-256 // S))             # ceil(256 / S)
            target = min(target, B // 2)              # keep >= 2 grid steps
            # Cap the x tile at ~8 MiB (x is double-buffered by the pipeline).
            bytes_per_row = S * D * jnp.dtype(x.dtype).itemsize
            vmem_cap = max(8, (8 << 20) // max(1, bytes_per_row))
            target = min(target, vmem_cap)
            tb = min(B, max(8, (target // 8) * 8))
    tb = max(1, min(tb, B))

    # Present the small params in lane-friendly layouts (done once in XLA, free).
    b1_row = jnp.asarray(b1).reshape(1, H)
    w2_row = jnp.asarray(w2).reshape(1, H)

    grid = (pl.cdiv(B, tb),)

    return pl.pallas_call(
        attention_kernel,
        out_shape=jax.ShapeDtypeStruct((B, D), x.dtype),
        grid_spec=pltpu.PrefetchScalarGridSpec(
            num_scalar_prefetch=0,
            grid=grid,
            in_specs=[
                pl.BlockSpec((tb, S, D), lambda i: (i, 0, 0)),   # x: TB batch rows
                pl.BlockSpec((D, H), lambda i: (0, 0)),          # W1 (resident)
                pl.BlockSpec((1, H), lambda i: (0, 0)),          # b1
                pl.BlockSpec((1, H), lambda i: (0, 0)),          # w2 as a row
            ],
            out_specs=pl.BlockSpec((tb, D), lambda i: (i, 0)),
        ),
        compiler_params=pltpu.CompilerParams(
            dimension_semantics=("parallel",),   # batch tiles are independent (megacore)
        ),
    )(x, w1, b1_row, w2_row)


def reference_forward(x, w1, b1, w2, b2):
    # Pure-JAX reference mirroring the PyTorch forward exactly (including b2).
    scores = jnp.tanh(x @ w1 + b1) @ w2 + b2          # (B, S, 1)
    weights = jax.nn.softmax(scores, axis=1)          # softmax over seq dim
    return jnp.sum(weights * x, axis=1)               # (B, D)


if __name__ == "__main__":
    # Small shapes consistent with the module: (batch, seq, input_dim), hidden_dim.
    # B=16 so the batch-tiled grid has 2 steps (exercises both TCs on v7x).
    B, S, D, H = 16, 8, 32, 16

    key = jax.random.PRNGKey(0)
    kx, kw1, kb1, kw2, kb2 = jax.random.split(key, 5)

    x = jax.random.normal(kx, (B, S, D), dtype=jnp.float32)
    # Deterministic synthetic parameters (nn.Linear-like scale).
    w1 = (jax.random.uniform(kw1, (D, H), minval=-1.0, maxval=1.0) / jnp.sqrt(D)).astype(jnp.float32)
    b1 = (jax.random.uniform(kb1, (1, H), minval=-1.0, maxval=1.0) / jnp.sqrt(D)).astype(jnp.float32)
    w2 = (jax.random.uniform(kw2, (H, 1), minval=-1.0, maxval=1.0) / jnp.sqrt(H)).astype(jnp.float32)
    b2 = (jax.random.uniform(kb2, (1, 1), minval=-1.0, maxval=1.0) / jnp.sqrt(H)).astype(jnp.float32)

    out = attention_forward(x, w1, b1, w2, b2)
    out = jax.block_until_ready(out)

    ref = reference_forward(x, w1, b1, w2, b2)
    assert out.shape == (B, D), out.shape
    # Tolerance loosened slightly vs f32-exact: the softmax denominator uses
    # the EUP approximate reciprocal (rel. err ~2^-12) and b2 is folded out
    # (exact mathematically, rounding differs at ~ulp level).
    max_err = jnp.max(jnp.abs(out - ref))
    assert jnp.allclose(out, ref, atol=2e-3, rtol=2e-3), f"max err {max_err}"

    print("KERNEL_OK")
</pallas_src>

<mosaic_0001>
module attributes {stable_mosaic.version = 11 : i64} {
  func.func @attention_kernel(%arg0: i32, %arg1: memref<8x8x32xf32, #tpu.memory_space<vmem>>, %arg2: memref<32x16xf32, #tpu.memory_space<vmem>>, %arg3: memref<1x16xf32, #tpu.memory_space<vmem>>, %arg4: memref<1x16xf32, #tpu.memory_space<vmem>>, %arg5: memref<8x32xf32, #tpu.memory_space<vmem>>) attributes {dimension_semantics = [#tpu.dimension_semantics<parallel>], iteration_bounds = array<i64: 2>, scalar_prefetch = 0 : i64, scratch_operands = 0 : i64, tpu.core_type = #tpu.core_type<tc>, window_params = [{transform_indices = @transform_0, window_bounds = array<i64: 8, 8, 32>}, {pipeline_mode = #tpu.pipeline_mode<synchronous>, transform_indices = @transform_1, window_bounds = array<i64: 32, 16>}, {pipeline_mode = #tpu.pipeline_mode<synchronous>, transform_indices = @transform_2, window_bounds = array<i64: 1, 16>}, {pipeline_mode = #tpu.pipeline_mode<synchronous>, transform_indices = @transform_3, window_bounds = array<i64: 1, 16>}, {transform_indices = @transform_4, window_bounds = array<i64: 8, 32>}]} {
    %c0 = arith.constant 0 : index
    %c0_0 = arith.constant 0 : index
    %c0_1 = arith.constant 0 : index
    %0 = vector.load %arg1[%c0, %c0_0, %c0_1] : memref<8x8x32xf32, #tpu.memory_space<vmem>>, vector<8x8x32xf32>
    %1 = vector.shape_cast %0 : vector<8x8x32xf32> to vector<64x32xf32>
    %c0_2 = arith.constant 0 : index
    %c0_3 = arith.constant 0 : index
    %2 = vector.load %arg2[%c0_2, %c0_3] : memref<32x16xf32, #tpu.memory_space<vmem>>, vector<32x16xf32>
    %cst = arith.constant dense<0.000000e+00> : vector<64x16xf32>
    %3 = tpu.matmul %1, %2, %cst {dimension_numbers = #tpu.dot_dimension_numbers<[1], [0], [0], [1], [0, 0, 1, 1], [], []>} : vector<64x32xf32>, vector<32x16xf32>, vector<64x16xf32> -> vector<64x16xf32>
    %c0_4 = arith.constant 0 : index
    %c0_5 = arith.constant 0 : index
    %4 = vector.load %arg3[%c0_4, %c0_5] : memref<1x16xf32, #tpu.memory_space<vmem>>, vector<1x16xf32>
    %5 = vector.broadcast %4 : vector<1x16xf32> to vector<64x16xf32>
    %6 = arith.addf %3, %5 : vector<64x16xf32>
    %7 = math.tanh %6 : vector<64x16xf32>
    %8 = vector.shape_cast %7 : vector<64x16xf32> to vector<8x8x16xf32>
    %c0_6 = arith.constant 0 : index
    %c0_7 = arith.constant 0 : index
    %9 = vector.load %arg4[%c0_6, %c0_7] : memref<1x16xf32, #tpu.memory_space<vmem>>, vector<1x16xf32>
    %10 = vector.shape_cast %9 : vector<1x16xf32> to vector<1x1x16xf32>
    %11 = vector.broadcast %10 : vector<1x1x16xf32> to vector<8x8x16xf32>
    %12 = arith.mulf %8, %11 : vector<8x8x16xf32>
    %cst_8 = arith.constant dense<0.000000e+00> : vector<8x8xf32>
    %13 = vector.multi_reduction <add>, %12, %cst_8 [2] : vector<8x8x16xf32> to vector<8x8xf32>
    %cst_9 = arith.constant dense<0xFF800000> : vector<8xf32>
    %14 = vector.multi_reduction <maximumf>, %13, %cst_9 [1] : vector<8x8xf32> to vector<8xf32>
    %15 = vector.shape_cast %14 : vector<8xf32> to vector<8x1xf32>
    %16 = vector.broadcast %15 : vector<8x1xf32> to vector<8x8xf32>
    %17 = arith.subf %13, %16 : vector<8x8xf32>
    %18 = math.exp %17 : vector<8x8xf32>
    %cst_10 = arith.constant dense<0.000000e+00> : vector<8xf32>
    %19 = vector.multi_reduction <add>, %18, %cst_10 [1] : vector<8x8xf32> to vector<8xf32>
    %20 = vector.shape_cast %19 : vector<8xf32> to vector<8x1xf32>
    %21 = tpu.reciprocal %20 {approx = true} : vector<8x1xf32> -> vector<8x1xf32>
    %22 = vector.broadcast %21 : vector<8x1xf32> to vector<8x8xf32>
    %23 = arith.mulf %18, %22 : vector<8x8xf32>
    %24 = vector.shape_cast %23 : vector<8x8xf32> to vector<8x1x8xf32>
    "tpu.trace_start"() <{level = 10 : i32, message = "bqs,bsd->bqd"}> : () -> ()
    %cst_11 = arith.constant dense<0.000000e+00> : vector<8x1x32xf32>
    %25 = tpu.matmul %24, %0, %cst_11 {dimension_numbers = #tpu.dot_dimension_numbers<[2], [1], [1], [2], [0, 0, 0, 1, 1, 2], [0], [0]>} : vector<8x1x8xf32>, vector<8x8x32xf32>, vector<8x1x32xf32> -> vector<8x1x32xf32>
    "tpu.trace_stop"() : () -> ()
    %26 = vector.shape_cast %25 : vector<8x1x32xf32> to vector<8x32xf32>
    %c0_12 = arith.constant 0 : index
    %c0_13 = arith.constant 0 : index
    %27 = vector.load %arg5[%c0_12, %c0_13] : memref<8x32xf32, #tpu.memory_space<vmem>>, vector<8x32xf32>
    tpu.vector_store %arg5[%c0_12, %c0_13], %26 {strides = array<i32>} : memref<8x32xf32, #tpu.memory_space<vmem>>, vector<8x32xf32>,
    return
  }
  func.func @transform_0(%arg0: i32) -> (i32, i32, i32) {
    %c0_i32 = arith.constant 0 : i32
    %c0_i32_0 = arith.constant 0 : i32
    %c0_i32_1 = arith.constant 0 : i32
    return %arg0, %c0_i32, %c0_i32_0 : i32, i32, i32
  }
  func.func @transform_1(%arg0: i32) -> (i32, i32) {
    %c0_i32 = arith.constant 0 : i32
    %c0_i32_0 = arith.constant 0 : i32
    %c0_i32_1 = arith.constant 0 : i32
    return %c0_i32, %c0_i32_0 : i32, i32
  }
  func.func @transform_2(%arg0: i32) -> (i32, i32) {
    %c0_i32 = arith.constant 0 : i32
    %c0_i32_0 = arith.constant 0 : i32
    %c0_i32_1 = arith.constant 0 : i32
    return %c0_i32, %c0_i32_0 : i32, i32
  }
  func.func @transform_3(%arg0: i32) -> (i32, i32) {
    %c0_i32 = arith.constant 0 : i32
    %c0_i32_0 = arith.constant 0 : i32
    %c0_i32_1 = arith.constant 0 : i32
    return %c0_i32, %c0_i32_0 : i32, i32
  }
  func.func @transform_4(%arg0: i32) -> (i32, i32) {
    %c0_i32 = arith.constant 0 : i32
    %c0_i32_0 = arith.constant 0 : i32
    return %arg0, %c0_i32 : i32, i32
  }
}

</mosaic_0001>

<llo_original>
// kernel: tpu_custom_call.1
$region0: #{tpu_custom_call.1}
  #allocation0 [shape = 'u32[]', space=smem, size = 0x4, offset = 0x4, fixed_abs, tag = 'smem constant byte address 0x4 - core index']
  #allocation1 [shape = 'u32[144,128]{1,0:T(1,128)}', space=vmem, size = 0x12000, scoped, tag = 'internal scratch']
  %s0 = inlined_call_operand.hbm [shape: f32[16,8,32], index: 0, kind: input, shape index: {}]
  %s1 = inlined_call_operand.vmem [shape: f32[32,16], index: 1, kind: input, shape index: {}]
  %s2 = inlined_call_operand.vmem [shape: f32[1,16], index: 2, kind: input, shape index: {}]
  %s3 = inlined_call_operand.vmem [shape: f32[1,16], index: 3, kind: input, shape index: {}]
  %s4 = inlined_call_operand.hbm [shape: f32[16,32], index: 4, kind: output, shape index: {}]
  %s5 = sld [smem:[#allocation0]]
  $region53: #{tpu_custom_call.1} parent=0
    _
  %s7 = ssub.s32 1, %s5
  %s8 = scalar_select 0, %s7, %s5
  $region1: #{tpu_custom_call.1} parent=0
    #allocation2 [shape = 'u8[65536]{0}', space=vmem, size = 0x10000, scoped, tag = 'input window, operand 0']
    #allocation3 [shape = 's32[2]{0}', space=sflag, size = 0x8, scoped, tag = 'scoped memory for tpu_custom_call.1']
    #allocation4 [shape = 's32[2]{0}', space=sflag, size = 0x8, scoped, tag = 'scoped memory for tpu_custom_call.1']
    #allocation5 [shape = 'u8[8192]{0}', space=vmem, size = 0x2000, scoped, tag = 'output window, operand 0']
    %9 = vsyncpa [#allocation3], 0
    %s10 = scalar_lea.sflag [#allocation3], 1
    %11 = vsyncpa %s10, 0
    %12 = vsyncpa [#allocation4], 0
    %s13 = scalar_lea.sflag [#allocation4], 1
    %14 = vsyncpa %s13, 0
    loop: start=0, step=1, limit=4
    $region2: #{tpu_custom_call.1} parent=1 // loop_pre_header
      _
    $region3: #{tpu_custom_call.1} parent=1 // loop_header
      %s16 = sphi 0, %s20
      %p17 = scmp.ge.s32.totalorder %s16, 4
      %s26 = sphi 0, %s28
      %s29 = sphi 0, %s26
      %s30 = sphi 0, %s29
      %s46 = sphi 0, %s30
      %s50 = sphi 0, %s50
      %s52 = sphi 0, %s50
      %s53 = sphi 0, %s52
      %s67 = sphi 0, %s53
      %s71 = sphi 0, %s71
      %s73 = sphi 0, %s71
      %s74 = sphi 0, %s73
      %s88 = sphi 0, %s74
      %s92 = sphi 0, %s92
      %s94 = sphi 0, %s92
      %s95 = sphi 0, %s94
      %s109 = sphi 0, %s95
      %s115 = sphi 0, %s117
      %s118 = sphi 0, %s115
      %s119 = sphi 0, %s118
      %s135 = sphi 0, %s119
    $region4: #{tpu_custom_call.1} parent=1 // loop_header_branch
      %19 = sbr.rel (%p17) target = $region8
    $region5: #{tpu_custom_call.1} parent=1 // loop_body
      %s21 = ssub.s32 %s16, 1
      %s22 = ssub.s32 %s16, 2
      %s23 = sadd.s32 %s16, 1
      %s24 = ssub.s32 %s16, %s23
      %p25 = scmp.eq.s32.totalorder %s24, 0
      %s27 = sadd.s32 %s26, 1
      %s28 = scalar_select %p25, %s26, %s27
      %p31 = pneg %p25
      %p32 = scmp.eq.s32.totalorder %s16, 1
      %p33 = por %p31, %p32
      %p34 = scmp.ne.s32.totalorder %s26, %s29
      %p35 = scmp.eq.s32.totalorder %s16, 0
      %p36 = por %p34, %p35
      %p37 = scmp.ne.s32.totalorder %s26, %s29
      %p38 = scmp.eq.s32.totalorder %s21, 1
      %p39 = por %p37, %p38
      %p40 = scmp.ne.s32.totalorder %s29, %s30
      %p41 = scmp.eq.s32.totalorder %s21, 0
      %p42 = por %p40, %p41
      %p43 = scmp.ne.s32.totalorder %s29, %s30
      %p44 = scmp.eq.s32.totalorder %s22, 1
      %p45 = por %p43, %p44
      %p47 = scmp.ne.s32.totalorder %s30, %s46
      %p48 = scmp.eq.s32.totalorder %s22, 0
      %p49 = por %p47, %p48
      %s51 = sadd.s32 %s50, 1
      %p54 = scmp.eq.s32.totalorder %s16, 1
      %p55 = scmp.ne.s32.totalorder %s50, %s52
      %p56 = scmp.eq.s32.totalorder %s16, 0
      %p57 = por %p55, %p56
      %p58 = scmp.ne.s32.totalorder %s50, %s52
      %p59 = scmp.eq.s32.totalorder %s21, 1
      %p60 = por %p58, %p59
      %p61 = scmp.ne.s32.totalorder %s52, %s53
      %p62 = scmp.eq.s32.totalorder %s21, 0
      %p63 = por %p61, %p62
      %p64 = scmp.ne.s32.totalorder %s52, %s53
      %p65 = scmp.eq.s32.totalorder %s22, 1
      %p66 = por %p64, %p65
      %p68 = scmp.ne.s32.totalorder %s53, %s67
      %p69 = scmp.eq.s32.totalorder %s22, 0
      %p70 = por %p68, %p69
      %s72 = sadd.s32 %s71, 1
      %p75 = scmp.eq.s32.totalorder %s16, 1
      %p76 = scmp.ne.s32.totalorder %s71, %s73
      %p77 = scmp.eq.s32.totalorder %s16, 0
      %p78 = por %p76, %p77
      %p79 = scmp.ne.s32.totalorder %s71, %s73
      %p80 = scmp.eq.s32.totalorder %s21, 1
      %p81 = por %p79, %p80
      %p82 = scmp.ne.s32.totalorder %s73, %s74
      %p83 = scmp.eq.s32.totalorder %s21, 0
      %p84 = por %p82, %p83
      %p85 = scmp.ne.s32.totalorder %s73, %s74
      %p86 = scmp.eq.s32.totalorder %s22, 1
      %p87 = por %p85, %p86
      %p89 = scmp.ne.s32.totalorder %s74, %s88
      %p90 = scmp.eq.s32.totalorder %s22, 0
      %p91 = por %p89, %p90
      %s93 = sadd.s32 %s92, 1
      %p96 = scmp.eq.s32.totalorder %s16, 1
      %p97 = scmp.ne.s32.totalorder %s92, %s94
      %p98 = scmp.eq.s32.totalorder %s16, 0
      %p99 = por %p97, %p98
      %p100 = scmp.ne.s32.totalorder %s92, %s94
      %p101 = scmp.eq.s32.totalorder %s21, 1
      %p102 = por %p100, %p101
      %p103 = scmp.ne.s32.totalorder %s94, %s95
      %p104 = scmp.eq.s32.totalorder %s21, 0
      %p105 = por %p103, %p104
      %p106 = scmp.ne.s32.totalorder %s94, %s95
      %p107 = scmp.eq.s32.totalorder %s22, 1
      %p108 = por %p106, %p107
      %p110 = scmp.ne.s32.totalorder %s95, %s109
      %p111 = scmp.eq.s32.totalorder %s22, 0
      %p112 = por %p110, %p111
      %s113 = ssub.s32 %s16, %s23
      %p114 = scmp.eq.s32.totalorder %s113, 0
      %s116 = sadd.s32 %s115, 1
      %s117 = scalar_select %p114, %s115, %s116
      %p120 = pneg %p114
      %p121 = scmp.eq.s32.totalorder %s16, 1
      %p122 = por %p120, %p121
      %p123 = scmp.ne.s32.totalorder %s115, %s118
      %p124 = scmp.eq.s32.totalorder %s16, 0
      %p125 = por %p123, %p124
      %p126 = scmp.ne.s32.totalorder %s115, %s118
      %p127 = scmp.eq.s32.totalorder %s21, 1
      %p128 = por %p126, %p127
      %p129 = scmp.ne.s32.totalorder %s118, %s119
      %p130 = scmp.eq.s32.totalorder %s21, 0
      %p131 = por %p129, %p130
      %p132 = scmp.ne.s32.totalorder %s118, %s119
      %p133 = scmp.eq.s32.totalorder %s22, 1
      %p134 = por %p132, %p133
      %p136 = scmp.ne.s32.totalorder %s119, %s135
      %p137 = scmp.eq.s32.totalorder %s22, 0
      %p138 = por %p136, %p137
      %p139 = scmp.le.s32.totalorder 1, %s16
      %p140 = scmp.lt.s32.totalorder %s16, 3
      %p141 = pnand %p139, %p140
      %p142 = pneg %p141
      // Predicated region
      $region9: #{tpu_custom_call.1} parent=5 // pred_check
        _
      $region10: #{tpu_custom_call.1} parent=5 // pred_check_branch
        %144 = sbr.rel (%p141) target = $region12
      $region11: #{tpu_custom_call.1} parent=5 // pred_region
        %s145 = ssub.s32 %s16, 1
        // Predicated region
        $region13: #{tpu_custom_call.1} parent=11 // pred_check
          %p146 = pneg %p63
        $region14: #{tpu_custom_call.1} parent=11 // pred_check_branch
          %148 = sbr.rel (%p146) target = $region16
        $region15: #{tpu_custom_call.1} parent=11 // pred_region
          _
        $region16: #{tpu_custom_call.1} parent=11 // pred_fallthru
          _
        // Predicated region
        $region17: #{tpu_custom_call.1} parent=11 // pred_check
          %p149 = pneg %p84
        $region18: #{tpu_custom_call.1} parent=11 // pred_check_branch
          %151 = sbr.rel (%p149) target = $region20
        $region19: #{tpu_custom_call.1} parent=11 // pred_region
          _
        $region20: #{tpu_custom_call.1} parent=11 // pred_fallthru
          _
        // Predicated region
        $region21: #{tpu_custom_call.1} parent=11 // pred_check
          %p152 = pneg %p105
        $region22: #{tpu_custom_call.1} parent=11 // pred_check_branch
          %154 = sbr.rel (%p152) target = $region24
        $region23: #{tpu_custom_call.1} parent=11 // pred_region
          _
        $region24: #{tpu_custom_call.1} parent=11 // pred_fallthru
          _
      $region12: #{tpu_custom_call.1} parent=5 // pred_fallthru
        _
      %p155 = scmp.lt.s32.totalorder %s16, 2
      // Predicated region
      $region25: #{tpu_custom_call.1} parent=5 // pred_check
        %p156 = pneg %p155
      $region26: #{tpu_custom_call.1} parent=5 // pred_check_branch
        %158 = sbr.rel (%p156) target = $region28
      $region27: #{tpu_custom_call.1} parent=5 // pred_region
        // Predicated region
        $region29: #{tpu_custom_call.1} parent=27 // pred_check
          %p159 = pneg %p36
        $region30: #{tpu_custom_call.1} parent=27 // pred_check_branch
          %161 = sbr.rel (%p159) target = $region32
        $region31: #{tpu_custom_call.1} parent=27 // pred_region
          %s162 = sand.u32 %s26, 1
          %s163 = scalar_lea.sflag [#allocation3], %s162
          %s164 = sand.u32 %s26, 1
          %s165 = smul.addr %s164, 64
          %s166 = scalar_lea.vmem [#allocation2], %s165
          %s167 = smul.u32 8, %s16
          %s169 = ssub.s32 1024, 1024
          %170 = vsyncadd %s163, %s169
          %s171 = smul.addr %s167, 128
          %s172 = scalar_lea.hbm %s0, %s171
          %s173 = sshll.u32 %s166, 4
          %s174 = int_to_ptr.vmem [resolvable:$true] %s173
          %179 = dma.hbm_to_vmem [thread:$0]  %s172, 1024, %s174, %s163, 128, 128, 8
        $region32: #{tpu_custom_call.1} parent=27 // pred_fallthru
          _
      $region28: #{tpu_custom_call.1} parent=5 // pred_fallthru
        _
      %p180 = scmp.le.s32.totalorder 1, %s16
      %p181 = scmp.lt.s32.totalorder %s16, 3
      %p182 = pnand %p180, %p181
      %p183 = pneg %p182
      // Predicated region
      $region33: #{tpu_custom_call.1} parent=5 // pred_check
        _
      $region34: #{tpu_custom_call.1} parent=5 // pred_check_branch
        %185 = sbr.rel (%p182) target = $region36
      $region35: #{tpu_custom_call.1} parent=5 // pred_region
        %s186 = ssub.s32 %s16, 1
        %s187 = sand.u32 %s29, 1
        %s188 = scalar_lea.sflag [#allocation3], %s187
        %s189 = sand.u32 %s29, 1
        %s190 = smul.addr %s189, 64
        %s191 = scalar_lea.vmem [#allocation2], %s190
        // Predicated region
        $region37: #{tpu_custom_call.1} parent=35 // pred_check
          %p192 = pneg %p42
        $region38: #{tpu_custom_call.1} parent=35 // pred_check_branch
          %194 = sbr.rel (%p192) target = $region40
        $region39: #{tpu_custom_call.1} parent=35 // pred_region
          %195 = dma.done %s188, 1024
        $region40: #{tpu_custom_call.1} parent=35 // pred_fallthru
          _
        %s196 = sand.u32 %s29, 1
        %s197 = scalar_lea.sflag [#allocation3], %s196
        %s198 = sand.u32 %s29, 1
        %s199 = smul.addr %s198, 64
        %s200 = scalar_lea.vmem [#allocation2], %s199
        %p201 = pneg %p42
        %p202 = pneg %p39
        %p203 = pneg %p63
        %p204 = pneg %p60
        %p205 = pneg %p84
        %p206 = pneg %p81
        %p207 = pneg %p105
        %p208 = pneg %p102
        %p209 = pneg %p131
        %p210 = pneg %p128
        %s211 = sand.u32 %s118, 1
        %s212 = scalar_lea.sflag [#allocation4], %s211
        %s213 = sand.u32 %s118, 1
        %s214 = smul.addr %s213, 8
        %s215 = scalar_lea.vmem [#allocation5], %s214
        %s216 = smul.u32 8, %s21
        %v217 = vld [vmem:[%s191] sm:$0xff]
        %v218 = vld [vmem:[%s191 + $0x8] sm:$0xff]
        %v219 = vld [vmem:[%s191 + $0x10] sm:$0xff]
        %v220 = vld [vmem:[%s191 + $0x18] sm:$0xff]
        %v221 = vld [vmem:[%s191 + $0x20] sm:$0xff]
        %v222 = vld [vmem:[%s191 + $0x28] sm:$0xff]
        %v223 = vld [vmem:[%s191 + $0x30] sm:$0xff]
        %v224 = vld [vmem:[%s191 + $0x38] sm:$0xff]
        %v225 = vld [vmem:[%s1] sm:$0xff]
        %v226 = vld [vmem:[%s1 + $0x8] sm:$0xff]
        %v227 = vld [vmem:[%s1 + $0x10] sm:$0xff]
        %v228 = vld [vmem:[%s1 + $0x18] sm:$0xff]
        %v229 = vld [vmem:[%s2] sm:$0x1]
        %v231 = vlaneseq
        %v232 = vshrl.u32 %v231, 7
        %v233 = vsub.s32 0, %v232
        %v234 = vrot.slane %v229, %v233
        %vm236 = vcmask 261120
        %v238 = vsel %vm236, %v217, 0
        %v241 = vsel %vm236, %v218, 0
        %v244 = vsel %vm236, %v219, 0
        %v247 = vsel %vm236, %v220, 0
        %v250 = vsel %vm236, %v221, 0
        %v253 = vsel %vm236, %v222, 0
        %v256 = vsel %vm236, %v223, 0
        %v259 = vsel %vm236, %v224, 0
        %261 = vmatprep.subr.mxu0 0.0
        %262 = vmatpush1.msra.mxu0 0.0
        %263 = vmatprep.subr.mxu0 0.0
        %264 = vmatpush1.msra.mxu0 0.0
        %265 = vmatprep.subr.mxu0 0.0
        %266 = vmatpush1.msra.mxu0 0.0
        %267 = vmatprep.subr.mxu0 0.0
        %268 = vmatpush1.msra.mxu0 0.0
        %269 = vmatprep.subr.mxu0 0.0
        %270 = vmatpush1.msra.mxu0 0.0
        %271 = vmatprep.subr.mxu0 0.0
        %272 = vmatpush1.msra.mxu0 0.0
        %273 = vmatprep.subr.mxu0 0.0
        %274 = vmatpush1.msra.mxu0 0.0
        %275 = vmatprep.subr.mxu0 0.0
        %276 = vmatpush1.msra.mxu0 0.0
        %277 = vmatprep.subr.mxu0 0.0
        %278 = vmatpush1.msra.mxu0 0.0
        %279 = vmatprep.subr.mxu0 0.0
        %280 = vmatpush1.msra.mxu0 0.0
        %281 = vmatprep.subr.mxu0 0.0
        %282 = vmatpush1.msra.mxu0 0.0
        %283 = vmatprep.subr.mxu0 0.0
        %284 = vmatpush1.msra.mxu0 0.0
        %285 = vmatprep.subr.mxu0 0.0
        %286 = vmatpush1.msra.mxu0 %v228
        %287 = vmatprep.subr.mxu0 0.0
        %288 = vmatpush1.msra.mxu0 %v227
        %289 = vmatprep.subr.mxu0 0.0
        %290 = vmatpush1.msra.mxu0 %v226
        %291 = vmatprep.subr.mxu0 0.0
        %292 = vmatpush1.msra.mxu0 %v225
        %293 = vmatprep.subr.mxu0 0.0
        %294 = vmatpush2.msra.mxu0 0.0
        %295 = vmatprep.subr.mxu0 0.0
        %296 = vmatpush2.msra.mxu0 0.0
        %297 = vmatprep.subr.mxu0 0.0
        %298 = vmatpush2.msra.mxu0 0.0
        %299 = vmatprep.subr.mxu0 0.0
        %300 = vmatpush2.msra.mxu0 0.0
        %301 = vmatprep.subr.mxu0 0.0
        %302 = vmatpush2.msra.mxu0 0.0
        %303 = vmatprep.subr.mxu0 0.0
        %304 = vmatpush2.msra.mxu0 0.0
        %305 = vmatprep.subr.mxu0 0.0
        %306 = vmatpush2.msra.mxu0 0.0
        %307 = vmatprep.subr.mxu0 0.0
        %308 = vmatpush2.msra.mxu0 0.0
        %309 = vmatprep.subr.mxu0 0.0
        %310 = vmatpush2.msra.mxu0 0.0
        %311 = vmatprep.subr.mxu0 0.0
        %312 = vmatpush2.msra.mxu0 0.0
        %313 = vmatprep.subr.mxu0 0.0
        %314 = vmatpush2.msra.mxu0 0.0
        %315 = vmatprep.subr.mxu0 0.0
        %316 = vmatpush2.msra.mxu0 0.0
        %317 = vmatprep.subr.mxu0 0.0
        %318 = vmatpush2.msra.mxu0 0.0
        %319 = vmatprep.subr.mxu0 0.0
        %320 = vmatpush2.msra.mxu0 0.0
        %321 = vmatprep.subr.mxu0 0.0
        %322 = vmatpush2.msra.mxu0 0.0
        %323 = vmatprep.subr.mxu0 0.0
        %324 = vmatpush2.msra.mxu0 0.0
        %325 = vmatprep.mubr.f32.mxu0 0.0
        %326 = vmatmul.mubr.f32.gmra.mxu0 %v238
        %v327 = vpop.f32.mrf.mxu0
        %v328 = vadd.f32 %v234, %v327
        %v329 = vpop.f32.mrf.mxu0
        %330 = vmatprep.mubr.f32.mxu0 0.0
        %331 = vmatmul.mubr.f32.gmra.mxu0 %v241
        %v332 = vpop.f32.mrf.mxu0
        %v333 = vadd.f32 %v234, %v332
        %v334 = vpop.f32.mrf.mxu0
        %335 = vmatprep.mubr.f32.mxu0 0.0
        %336 = vmatmul.mubr.f32.gmra.mxu0 %v244
        %v337 = vpop.f32.mrf.mxu0
        %v338 = vadd.f32 %v234, %v337
        %v339 = vpop.f32.mrf.mxu0
        %340 = vmatprep.mubr.f32.mxu0 0.0
        %341 = vmatmul.mubr.f32.gmra.mxu0 %v247
        %v342 = vpop.f32.mrf.mxu0
        %v343 = vadd.f32 %v234, %v342
        %v344 = vpop.f32.mrf.mxu0
        %345 = vmatprep.mubr.f32.mxu0 0.0
        %346 = vmatmul.mubr.f32.gmra.mxu0 %v250
        %v347 = vpop.f32.mrf.mxu0
        %v348 = vadd.f32 %v234, %v347
        %v349 = vpop.f32.mrf.mxu0
        %350 = vmatprep.mubr.f32.mxu0 0.0
        %351 = vmatmul.mubr.f32.gmra.mxu0 %v253
        %v352 = vpop.f32.mrf.mxu0
        %v353 = vadd.f32 %v234, %v352
        %v354 = vpop.f32.mrf.mxu0
        %355 = vmatprep.mubr.f32.mxu0 0.0
        %356 = vmatmul.mubr.f32.gmra.mxu0 %v256
        %v357 = vpop.f32.mrf.mxu0
        %v358 = vadd.f32 %v234, %v357
        %v359 = vpop.f32.mrf.mxu0
        %360 = vmatprep.mubr.f32.mxu0 0.0
        %361 = vmatmul.mubr.f32.gmra.mxu0 %v259
        %v362 = vpop.f32.mrf.mxu0
        %v363 = vadd.f32 %v234, %v362
        %v364 = vpop.f32.mrf.mxu0
        %365 = vdwg.mxu0
        %v366 = vtanh.pop %v328
        %v367 = vtanh.pop %v333
        %v368 = vtanh.pop %v338
        %v369 = vtanh.pop %v343
        %v370 = vtanh.pop %v348
        %v371 = vtanh.pop %v353
        %v372 = vtanh.pop %v358
        %v373 = vtanh.pop %v363
        %v374 = vld [vmem:[%s3] sm:$0x1]
        %v376 = vlaneseq
        %v377 = vshrl.u32 %v376, 7
        %v378 = vsub.s32 0, %v377
        %v379 = vrot.slane %v374, %v378
        %v381 = vmul.f32 %v366, %v379
        %v382 = vmul.f32 %v367, %v379
        %v383 = vmul.f32 %v368, %v379
        %v384 = vmul.f32 %v369, %v379
        %v385 = vmul.f32 %v370, %v379
        %v386 = vmul.f32 %v371, %v379
        %v387 = vmul.f32 %v372, %v379
        %v388 = vmul.f32 %v373, %v379
        %vm389 = vcmask 130048
        %v390 = vsel %vm389, %v381, 0.0
        %391 = vadd.xlane.f32.xlu0 %v390
        %v392 = vpop.xlane.xlu0 %391
        %v393 = vsel %vm389, %v382, 0.0
        %394 = vadd.xlane.f32.xlu0 %v393
        %v395 = vpop.xlane.xlu0 %394
        %v396 = vsel %vm389, %v383, 0.0
        %397 = vadd.xlane.f32.xlu0 %v396
        %v398 = vpop.xlane.xlu0 %397
        %v399 = vsel %vm389, %v384, 0.0
        %400 = vadd.xlane.f32.xlu0 %v399
        %v401 = vpop.xlane.xlu0 %400
        %v402 = vsel %vm389, %v385, 0.0
        %403 = vadd.xlane.f32.xlu0 %v402
        %v404 = vpop.xlane.xlu0 %403
        %v405 = vsel %vm389, %v386, 0.0
        %406 = vadd.xlane.f32.xlu0 %v405
        %v407 = vpop.xlane.xlu0 %406
        %v408 = vsel %vm389, %v387, 0.0
        %409 = vadd.xlane.f32.xlu0 %v408
        %v410 = vpop.xlane.xlu0 %409
        %v411 = vsel %vm389, %v388, 0.0
        %412 = vadd.xlane.f32.xlu0 %v411
        %v413 = vpop.xlane.xlu0 %412
        %v422 = vlaneseq
        %v423 = vand.u32 %v422, 127
        %v424 = vlaneseq
        %v425 = vshrl.u32 %v424, 7
        %v426 = vsub.s32 %v423, %v425
        %v427 = vrot.slane %v392, %v426
        %v428 = vlaneseq
        %v429 = vshrl.u32 %v428, 7
        %v430 = vsub.s32 %v423, %v429
        %v431 = vrot.slane %v395, %v430
        %v432 = vlaneseq
        %v433 = vshrl.u32 %v432, 7
        %v434 = vsub.s32 %v423, %v433
        %v435 = vrot.slane %v398, %v434
        %v436 = vlaneseq
        %v437 = vshrl.u32 %v436, 7
        %v438 = vsub.s32 %v423, %v437
        %v439 = vrot.slane %v401, %v438
        %v440 = vlaneseq
        %v441 = vshrl.u32 %v440, 7
        %v442 = vsub.s32 %v423, %v441
        %v443 = vrot.slane %v404, %v442
        %v444 = vlaneseq
        %v445 = vshrl.u32 %v444, 7
        %v446 = vsub.s32 %v423, %v445
        %v447 = vrot.slane %v407, %v446
        %v448 = vlaneseq
        %v449 = vshrl.u32 %v448, 7
        %v450 = vsub.s32 %v423, %v449
        %v451 = vrot.slane %v410, %v450
        %v452 = vlaneseq
        %v453 = vshrl.u32 %v452, 7
        %v454 = vsub.s32 %v423, %v453
        %v455 = vrot.slane %v413, %v454
        %vm456 = vcmask 1041409
        %v457 = vsel %vm456, %v431, %v427
        %vm458 = vcmask 1042434
        %v459 = vsel %vm458, %v435, %v457
        %vm460 = vcmask 1043459
        %v461 = vsel %vm460, %v439, %v459
        %vm462 = vcmask 1044484
        %v463 = vsel %vm462, %v443, %v461
        %vm464 = vcmask 1045509
        %v465 = vsel %vm464, %v447, %v463
        %vm466 = vcmask 1046534
        %v467 = vsel %vm466, %v451, %v465
        %vm468 = vcmask 1047559
        %v469 = vsel %vm468, %v455, %v467
        %vm471 = vcmask 64512
        %v472 = vsel %vm471, %v469, -inf
        %473 = vmax.xlane.f32.xlu0 %v472
        %v474 = vpop.xlane.xlu0 %473
        %v476 = vlaneseq
        %v477 = vshrl.u32 %v476, 7
        %v478 = vsub.s32 0, %v477
        %v479 = vrot.slane %v474, %v478
        %v480 = vlaneseq
        %v481 = vshrl.u32 %v480, 7
        %v482 = vsub.s32 1, %v481
        %v483 = vrot.slane %v474, %v482
        %v484 = vlaneseq
        %v485 = vshrl.u32 %v484, 7
        %v486 = vsub.s32 2, %v485
        %v487 = vrot.slane %v474, %v486
        %v488 = vlaneseq
        %v489 = vshrl.u32 %v488, 7
        %v490 = vsub.s32 3, %v489
        %v491 = vrot.slane %v474, %v490
        %v492 = vlaneseq
        %v493 = vshrl.u32 %v492, 7
        %v494 = vsub.s32 4, %v493
        %v495 = vrot.slane %v474, %v494
        %v496 = vlaneseq
        %v497 = vshrl.u32 %v496, 7
        %v498 = vsub.s32 5, %v497
        %v499 = vrot.slane %v474, %v498
        %v500 = vlaneseq
        %v501 = vshrl.u32 %v500, 7
        %v502 = vsub.s32 6, %v501
        %v503 = vrot.slane %v474, %v502
        %v504 = vlaneseq
        %v505 = vshrl.u32 %v504, 7
        %v506 = vsub.s32 7, %v505
        %v507 = vrot.slane %v474, %v506
        %v516 = vsub.f32 %v392, %v479
        %v517 = vsub.f32 %v395, %v483
        %v518 = vsub.f32 %v398, %v487
        %v519 = vsub.f32 %v401, %v491
        %v520 = vsub.f32 %v404, %v495
        %v521 = vsub.f32 %v407, %v499
        %v522 = vsub.f32 %v410, %v503
        %v523 = vsub.f32 %v413, %v507
        %v524 = vmul.f32 %v516, 1.442695
        %v525 = vpow.pop %v524
        %v526 = vmul.f32 %v517, 1.442695
        %v527 = vpow.pop %v526
        %v528 = vmul.f32 %v518, 1.442695
        %v529 = vpow.pop %v528
        %v530 = vmul.f32 %v519, 1.442695
        %v531 = vpow.pop %v530
        %v532 = vmul.f32 %v520, 1.442695
        %v533 = vpow.pop %v532
        %v534 = vmul.f32 %v521, 1.442695
        %v535 = vpow.pop %v534
        %v536 = vmul.f32 %v522, 1.442695
        %v537 = vpow.pop %v536
        %v538 = vmul.f32 %v523, 1.442695
        %v539 = vpow.pop %v538
        %548 = vset.pattern.permute.xlu0 0
        %549 = vperm.xlu0 %548, %v525
        %v550 = vpop.permute.xlu0 %549
        %551 = vset.pattern.permute.xlu0 0
        %552 = vperm.xlu0 %551, %v527
        %v553 = vpop.permute.xlu0 %552
        %554 = vset.pattern.permute.xlu0 0
        %555 = vperm.xlu0 %554, %v529
        %v556 = vpop.permute.xlu0 %555
        %557 = vset.pattern.permute.xlu0 0
        %558 = vperm.xlu0 %557, %v531
        %v559 = vpop.permute.xlu0 %558
        %560 = vset.pattern.permute.xlu0 0
        %561 = vperm.xlu0 %560, %v533
        %v562 = vpop.permute.xlu0 %561
        %563 = vset.pattern.permute.xlu0 0
        %564 = vperm.xlu0 %563, %v535
        %v565 = vpop.permute.xlu0 %564
        %566 = vset.pattern.permute.xlu0 0
        %567 = vperm.xlu0 %566, %v537
        %v568 = vpop.permute.xlu0 %567
        %569 = vset.pattern.permute.xlu0 0
        %570 = vperm.xlu0 %569, %v539
        %v571 = vpop.permute.xlu0 %570
        %v572 = vlaneseq
        %v573 = vshrl.u32 %v572, 7
        %v574 = vsub.s32 %v423, %v573
        %v575 = vrot.slane %v550, %v574
        %v576 = vlaneseq
        %v577 = vshrl.u32 %v576, 7
        %v578 = vsub.s32 %v423, %v577
        %v579 = vrot.slane %v553, %v578
        %v580 = vlaneseq
        %v581 = vshrl.u32 %v580, 7
        %v582 = vsub.s32 %v423, %v581
        %v583 = vrot.slane %v556, %v582
        %v584 = vlaneseq
        %v585 = vshrl.u32 %v584, 7
        %v586 = vsub.s32 %v423, %v585
        %v587 = vrot.slane %v559, %v586
        %v588 = vlaneseq
        %v589 = vshrl.u32 %v588, 7
        %v590 = vsub.s32 %v423, %v589
        %v591 = vrot.slane %v562, %v590
        %v592 = vlaneseq
        %v593 = vshrl.u32 %v592, 7
        %v594 = vsub.s32 %v423, %v593
        %v595 = vrot.slane %v565, %v594
        %v596 = vlaneseq
        %v597 = vshrl.u32 %v596, 7
        %v598 = vsub.s32 %v423, %v597
        %v599 = vrot.slane %v568, %v598
        %v600 = vlaneseq
        %v601 = vshrl.u32 %v600, 7
        %v602 = vsub.s32 %v423, %v601
        %v603 = vrot.slane %v571, %v602
        %v604 = vsel %vm456, %v579, %v575
        %v605 = vsel %vm458, %v583, %v604
        %v606 = vsel %vm460, %v587, %v605
        %v607 = vsel %vm462, %v591, %v606
        %v608 = vsel %vm464, %v595, %v607
        %v609 = vsel %vm466, %v599, %v608
        %v610 = vsel %vm468, %v603, %v609
        %v612 = vsel %vm471, %v610, 0.0
        %613 = vadd.xlane.f32.xlu0 %v612
        %v614 = vpop.xlane.xlu0 %613
        %v615 = vrcp.pop %v614
        %v617 = vlaneseq
        %v618 = vshrl.u32 %v617, 7
        %v619 = vsub.s32 0, %v618
        %v620 = vrot.slane %v615, %v619
        %v621 = vlaneseq
        %v622 = vshrl.u32 %v621, 7
        %v623 = vsub.s32 1, %v622
        %v624 = vrot.slane %v615, %v623
        %v625 = vlaneseq
        %v626 = vshrl.u32 %v625, 7
        %v627 = vsub.s32 2, %v626
        %v628 = vrot.slane %v615, %v627
        %v629 = vlaneseq
        %v630 = vshrl.u32 %v629, 7
        %v631 = vsub.s32 3, %v630
        %v632 = vrot.slane %v615, %v631
        %v633 = vlaneseq
        %v634 = vshrl.u32 %v633, 7
        %v635 = vsub.s32 4, %v634
        %v636 = vrot.slane %v615, %v635
        %v637 = vlaneseq
        %v638 = vshrl.u32 %v637, 7
        %v639 = vsub.s32 5, %v638
        %v640 = vrot.slane %v615, %v639
        %v641 = vlaneseq
        %v642 = vshrl.u32 %v641, 7
        %v643 = vsub.s32 6, %v642
        %v644 = vrot.slane %v615, %v643
        %v645 = vlaneseq
        %v646 = vshrl.u32 %v645, 7
        %v647 = vsub.s32 7, %v646
        %v648 = vrot.slane %v615, %v647
        %v657 = vmul.f32 %v525, %v620
        %v658 = vmul.f32 %v527, %v624
        %v659 = vmul.f32 %v529, %v628
        %v660 = vmul.f32 %v531, %v632
        %v661 = vmul.f32 %v533, %v636
        %v662 = vmul.f32 %v535, %v640
        %v663 = vmul.f32 %v537, %v644
        %v664 = vmul.f32 %v539, %v648
        %666 = vset.pattern.permute.xlu0 0
        %667 = vperm.xlu0 %666, %v657
        %v668 = vpop.permute.xlu0 %667
        %v669 = vlaneseq
        %v670 = vshrl.u32 %v669, 7
        %v671 = vsub.s32 %v423, %v670
        %v672 = vrot.slane %v668, %v671
        %v673 = vsel %vm471, %v672, 0
        %675 = vmatprep.subr.mxu0 0.0
        %676 = vmatpush1.msra.mxu0 0.0
        %677 = vmatprep.subr.mxu0 0.0
        %678 = vmatpush1.msra.mxu0 0.0
        %679 = vmatprep.subr.mxu0 0.0
        %680 = vmatpush1.msra.mxu0 0.0
        %681 = vmatprep.subr.mxu0 0.0
        %682 = vmatpush1.msra.mxu0 0.0
        %683 = vmatprep.subr.mxu0 0.0
        %684 = vmatpush1.msra.mxu0 0.0
        %685 = vmatprep.subr.mxu0 0.0
        %686 = vmatpush1.msra.mxu0 0.0
        %687 = vmatprep.subr.mxu0 0.0
        %688 = vmatpush1.msra.mxu0 0.0
        %689 = vmatprep.subr.mxu0 0.0
        %690 = vmatpush1.msra.mxu0 0.0
        %691 = vmatprep.subr.mxu0 0.0
        %692 = vmatpush1.msra.mxu0 0.0
        %693 = vmatprep.subr.mxu0 0.0
        %694 = vmatpush1.msra.mxu0 0.0
        %695 = vmatprep.subr.mxu0 0.0
        %696 = vmatpush1.msra.mxu0 0.0
        %697 = vmatprep.subr.mxu0 0.0
        %698 = vmatpush1.msra.mxu0 0.0
        %699 = vmatprep.subr.mxu0 0.0
        %700 = vmatpush1.msra.mxu0 0.0
        %701 = vmatprep.subr.mxu0 0.0
        %702 = vmatpush1.msra.mxu0 0.0
        %703 = vmatprep.subr.mxu0 0.0
        %704 = vmatpush1.msra.mxu0 0.0
        %705 = vmatprep.subr.mxu0 0.0
        %706 = vmatpush1.msra.mxu0 %v217
        %707 = vmatprep.subr.mxu0 0.0
        %708 = vmatpush2.msra.mxu0 0.0
        %709 = vmatprep.subr.mxu0 0.0
        %710 = vmatpush2.msra.mxu0 0.0
        %711 = vmatprep.subr.mxu0 0.0
        %712 = vmatpush2.msra.mxu0 0.0
        %713 = vmatprep.subr.mxu0 0.0
        %714 = vmatpush2.msra.mxu0 0.0
        %715 = vmatprep.subr.mxu0 0.0
        %716 = vmatpush2.msra.mxu0 0.0
        %717 = vmatprep.subr.mxu0 0.0
        %718 = vmatpush2.msra.mxu0 0.0
        %719 = vmatprep.subr.mxu0 0.0
        %720 = vmatpush2.msra.mxu0 0.0
        %721 = vmatprep.subr.mxu0 0.0
        %722 = vmatpush2.msra.mxu0 0.0
        %723 = vmatprep.subr.mxu0 0.0
        %724 = vmatpush2.msra.mxu0 0.0
        %725 = vmatprep.subr.mxu0 0.0
        %726 = vmatpush2.msra.mxu0 0.0
        %727 = vmatprep.subr.mxu0 0.0
        %728 = vmatpush2.msra.mxu0 0.0
        %729 = vmatprep.subr.mxu0 0.0
        %730 = vmatpush2.msra.mxu0 0.0
        %731 = vmatprep.subr.mxu0 0.0
        %732 = vmatpush2.msra.mxu0 0.0
        %733 = vmatprep.subr.mxu0 0.0
        %734 = vmatpush2.msra.mxu0 0.0
        %735 = vmatprep.subr.mxu0 0.0
        %736 = vmatpush2.msra.mxu0 0.0
        %737 = vmatprep.subr.mxu0 0.0
        %738 = vmatpush2.msra.mxu0 0.0
        %739 = vmatprep.mubr.f32.mxu0 0.0
        %740 = vmatmul.mubr.f32.gmra.mxu0 %v673
        %v741 = vpop.f32.mrf.mxu0
        %v742 = vadd.f32 0.0, %v741
        %v743 = vpop.f32.mrf.mxu0
        %744 = vdwg.mxu0
        %746 = vset.pattern.permute.xlu0 0
        %747 = vperm.xlu0 %746, %v658
        %v748 = vpop.permute.xlu0 %747
        %v749 = vlaneseq
        %v750 = vshrl.u32 %v749, 7
        %v751 = vsub.s32 %v423, %v750
        %v752 = vrot.slane %v748, %v751
        %v753 = vsel %vm471, %v752, 0
        %755 = vmatprep.subr.mxu0 0.0
        %756 = vmatpush1.msra.mxu0 0.0
        %757 = vmatprep.subr.mxu0 0.0
        %758 = vmatpush1.msra.mxu0 0.0
        %759 = vmatprep.subr.mxu0 0.0
        %760 = vmatpush1.msra.mxu0 0.0
        %761 = vmatprep.subr.mxu0 0.0
        %762 = vmatpush1.msra.mxu0 0.0
        %763 = vmatprep.subr.mxu0 0.0
        %764 = vmatpush1.msra.mxu0 0.0
        %765 = vmatprep.subr.mxu0 0.0
        %766 = vmatpush1.msra.mxu0 0.0
        %767 = vmatprep.subr.mxu0 0.0
        %768 = vmatpush1.msra.mxu0 0.0
        %769 = vmatprep.subr.mxu0 0.0
        %770 = vmatpush1.msra.mxu0 0.0
        %771 = vmatprep.subr.mxu0 0.0
        %772 = vmatpush1.msra.mxu0 0.0
        %773 = vmatprep.subr.mxu0 0.0
        %774 = vmatpush1.msra.mxu0 0.0
        %775 = vmatprep.subr.mxu0 0.0
        %776 = vmatpush1.msra.mxu0 0.0
        %777 = vmatprep.subr.mxu0 0.0
        %778 = vmatpush1.msra.mxu0 0.0
        %779 = vmatprep.subr.mxu0 0.0
        %780 = vmatpush1.msra.mxu0 0.0
        %781 = vmatprep.subr.mxu0 0.0
        %782 = vmatpush1.msra.mxu0 0.0
        %783 = vmatprep.subr.mxu0 0.0
        %784 = vmatpush1.msra.mxu0 0.0
        %785 = vmatprep.subr.mxu0 0.0
        %786 = vmatpush1.msra.mxu0 %v218
        %787 = vmatprep.subr.mxu0 0.0
        %788 = vmatpush2.msra.mxu0 0.0
        %789 = vmatprep.subr.mxu0 0.0
        %790 = vmatpush2.msra.mxu0 0.0
        %791 = vmatprep.subr.mxu0 0.0
        %792 = vmatpush2.msra.mxu0 0.0
        %793 = vmatprep.subr.mxu0 0.0
        %794 = vmatpush2.msra.mxu0 0.0
        %795 = vmatprep.subr.mxu0 0.0
        %796 = vmatpush2.msra.mxu0 0.0
        %797 = vmatprep.subr.mxu0 0.0
        %798 = vmatpush2.msra.mxu0 0.0
        %799 = vmatprep.subr.mxu0 0.0
        %800 = vmatpush2.msra.mxu0 0.0
        %801 = vmatprep.subr.mxu0 0.0
        %802 = vmatpush2.msra.mxu0 0.0
        %803 = vmatprep.subr.mxu0 0.0
        %804 = vmatpush2.msra.mxu0 0.0
        %805 = vmatprep.subr.mxu0 0.0
        %806 = vmatpush2.msra.mxu0 0.0
        %807 = vmatprep.subr.mxu0 0.0
        %808 = vmatpush2.msra.mxu0 0.0
        %809 = vmatprep.subr.mxu0 0.0
        %810 = vmatpush2.msra.mxu0 0.0
        %811 = vmatprep.subr.mxu0 0.0
        %812 = vmatpush2.msra.mxu0 0.0
        %813 = vmatprep.subr.mxu0 0.0
        %814 = vmatpush2.msra.mxu0 0.0
        %815 = vmatprep.subr.mxu0 0.0
        %816 = vmatpush2.msra.mxu0 0.0
        %817 = vmatprep.subr.mxu0 0.0
        %818 = vmatpush2.msra.mxu0 0.0
        %819 = vmatprep.mubr.f32.mxu0 0.0
        %820 = vmatmul.mubr.f32.gmra.mxu0 %v753
        %v821 = vpop.f32.mrf.mxu0
        %v822 = vadd.f32 0.0, %v821
        %v823 = vpop.f32.mrf.mxu0
        %824 = vdwg.mxu0
        %826 = vset.pattern.permute.xlu0 0
        %827 = vperm.xlu0 %826, %v659
        %v828 = vpop.permute.xlu0 %827
        %v829 = vlaneseq
        %v830 = vshrl.u32 %v829, 7
        %v831 = vsub.s32 %v423, %v830
        %v832 = vrot.slane %v828, %v831
        %v833 = vsel %vm471, %v832, 0
        %835 = vmatprep.subr.mxu0 0.0
        %836 = vmatpush1.msra.mxu0 0.0
        %837 = vmatprep.subr.mxu0 0.0
        %838 = vmatpush1.msra.mxu0 0.0
        %839 = vmatprep.subr.mxu0 0.0
        %840 = vmatpush1.msra.mxu0 0.0
        %841 = vmatprep.subr.mxu0 0.0
        %842 = vmatpush1.msra.mxu0 0.0
        %843 = vmatprep.subr.mxu0 0.0
        %844 = vmatpush1.msra.mxu0 0.0
        %845 = vmatprep.subr.mxu0 0.0
        %846 = vmatpush1.msra.mxu0 0.0
        %847 = vmatprep.subr.mxu0 0.0
        %848 = vmatpush1.msra.mxu0 0.0
        %849 = vmatprep.subr.mxu0 0.0
        %850 = vmatpush1.msra.mxu0 0.0
        %851 = vmatprep.subr.mxu0 0.0
        %852 = vmatpush1.msra.mxu0 0.0
        %853 = vmatprep.subr.mxu0 0.0
        %854 = vmatpush1.msra.mxu0 0.0
        %855 = vmatprep.subr.mxu0 0.0
        %856 = vmatpush1.msra.mxu0 0.0
        %857 = vmatprep.subr.mxu0 0.0
        %858 = vmatpush1.msra.mxu0 0.0
        %859 = vmatprep.subr.mxu0 0.0
        %860 = vmatpush1.msra.mxu0 0.0
        %861 = vmatprep.subr.mxu0 0.0
        %862 = vmatpush1.msra.mxu0 0.0
        %863 = vmatprep.subr.mxu0 0.0
        %864 = vmatpush1.msra.mxu0 0.0
        %865 = vmatprep.subr.mxu0 0.0
        %866 = vmatpush1.msra.mxu0 %v219
        %867 = vmatprep.subr.mxu0 0.0
        %868 = vmatpush2.msra.mxu0 0.0
        %869 = vmatprep.subr.mxu0 0.0
        %870 = vmatpush2.msra.mxu0 0.0
        %871 = vmatprep.subr.mxu0 0.0
        %872 = vmatpush2.msra.mxu0 0.0
        %873 = vmatprep.subr.mxu0 0.0
        %874 = vmatpush2.msra.mxu0 0.0
        %875 = vmatprep.subr.mxu0 0.0
        %876 = vmatpush2.msra.mxu0 0.0
        %877 = vmatprep.subr.mxu0 0.0
        %878 = vmatpush2.msra.mxu0 0.0
        %879 = vmatprep.subr.mxu0 0.0
        %880 = vmatpush2.msra.mxu0 0.0
        %881 = vmatprep.subr.mxu0 0.0
        %882 = vmatpush2.msra.mxu0 0.0
        %883 = vmatprep.subr.mxu0 0.0
        %884 = vmatpush2.msra.mxu0 0.0
        %885 = vmatprep.subr.mxu0 0.0
        %886 = vmatpush2.msra.mxu0 0.0
        %887 = vmatprep.subr.mxu0 0.0
        %888 = vmatpush2.msra.mxu0 0.0
        %889 = vmatprep.subr.mxu0 0.0
        %890 = vmatpush2.msra.mxu0 0.0
        %891 = vmatprep.subr.mxu0 0.0
        %892 = vmatpush2.msra.mxu0 0.0
        %893 = vmatprep.subr.mxu0 0.0
        %894 = vmatpush2.msra.mxu0 0.0
        %895 = vmatprep.subr.mxu0 0.0
        %896 = vmatpush2.msra.mxu0 0.0
        %897 = vmatprep.subr.mxu0 0.0
        %898 = vmatpush2.msra.mxu0 0.0
        %899 = vmatprep.mubr.f32.mxu0 0.0
        %900 = vmatmul.mubr.f32.gmra.mxu0 %v833
        %v901 = vpop.f32.mrf.mxu0
        %v902 = vadd.f32 0.0, %v901
        %v903 = vpop.f32.mrf.mxu0
        %904 = vdwg.mxu0
        %906 = vset.pattern.permute.xlu0 0
        %907 = vperm.xlu0 %906, %v660
        %v908 = vpop.permute.xlu0 %907
        %v909 = vlaneseq
        %v910 = vshrl.u32 %v909, 7
        %v911 = vsub.s32 %v423, %v910
        %v912 = vrot.slane %v908, %v911
        %v913 = vsel %vm471, %v912, 0
        %915 = vmatprep.subr.mxu0 0.0
        %916 = vmatpush1.msra.mxu0 0.0
        %917 = vmatprep.subr.mxu0 0.0
        %918 = vmatpush1.msra.mxu0 0.0
        %919 = vmatprep.subr.mxu0 0.0
        %920 = vmatpush1.msra.mxu0 0.0
        %921 = vmatprep.subr.mxu0 0.0
        %922 = vmatpush1.msra.mxu0 0.0
        %923 = vmatprep.subr.mxu0 0.0
        %924 = vmatpush1.msra.mxu0 0.0
        %925 = vmatprep.subr.mxu0 0.0
        %926 = vmatpush1.msra.mxu0 0.0
        %927 = vmatprep.subr.mxu0 0.0
        %928 = vmatpush1.msra.mxu0 0.0
        %929 = vmatprep.subr.mxu0 0.0
        %930 = vmatpush1.msra.mxu0 0.0
        %931 = vmatprep.subr.mxu0 0.0
        %932 = vmatpush1.msra.mxu0 0.0
        %933 = vmatprep.subr.mxu0 0.0
        %934 = vmatpush1.msra.mxu0 0.0
        %935 = vmatprep.subr.mxu0 0.0
        %936 = vmatpush1.msra.mxu0 0.0
        %937 = vmatprep.subr.mxu0 0.0
        %938 = vmatpush1.msra.mxu0 0.0
        %939 = vmatprep.subr.mxu0 0.0
        %940 = vmatpush1.msra.mxu0 0.0
        %941 = vmatprep.subr.mxu0 0.0
        %942 = vmatpush1.msra.mxu0 0.0
        %943 = vmatprep.subr.mxu0 0.0
        %944 = vmatpush1.msra.mxu0 0.0
        %945 = vmatprep.subr.mxu0 0.0
        %946 = vmatpush1.msra.mxu0 %v220
        %947 = vmatprep.subr.mxu0 0.0
        %948 = vmatpush2.msra.mxu0 0.0
        %949 = vmatprep.subr.mxu0 0.0
        %950 = vmatpush2.msra.mxu0 0.0
        %951 = vmatprep.subr.mxu0 0.0
        %952 = vmatpush2.msra.mxu0 0.0
        %953 = vmatprep.subr.mxu0 0.0
        %954 = vmatpush2.msra.mxu0 0.0
        %955 = vmatprep.subr.mxu0 0.0
        %956 = vmatpush2.msra.mxu0 0.0
        %957 = vmatprep.subr.mxu0 0.0
        %958 = vmatpush2.msra.mxu0 0.0
        %959 = vmatprep.subr.mxu0 0.0
        %960 = vmatpush2.msra.mxu0 0.0
        %961 = vmatprep.subr.mxu0 0.0
        %962 = vmatpush2.msra.mxu0 0.0
        %963 = vmatprep.subr.mxu0 0.0
        %964 = vmatpush2.msra.mxu0 0.0
        %965 = vmatprep.subr.mxu0 0.0
        %966 = vmatpush2.msra.mxu0 0.0
        %967 = vmatprep.subr.mxu0 0.0
        %968 = vmatpush2.msra.mxu0 0.0
        %969 = vmatprep.subr.mxu0 0.0
        %970 = vmatpush2.msra.mxu0 0.0
        %971 = vmatprep.subr.mxu0 0.0
        %972 = vmatpush2.msra.mxu0 0.0
        %973 = vmatprep.subr.mxu0 0.0
        %974 = vmatpush2.msra.mxu0 0.0
        %975 = vmatprep.subr.mxu0 0.0
        %976 = vmatpush2.msra.mxu0 0.0
        %977 = vmatprep.subr.mxu0 0.0
        %978 = vmatpush2.msra.mxu0 0.0
        %979 = vmatprep.mubr.f32.mxu0 0.0
        %980 = vmatmul.mubr.f32.gmra.mxu0 %v913
        %v981 = vpop.f32.mrf.mxu0
        %v982 = vadd.f32 0.0, %v981
        %v983 = vpop.f32.mrf.mxu0
        %984 = vdwg.mxu0
        %986 = vset.pattern.permute.xlu0 0
        %987 = vperm.xlu0 %986, %v661
        %v988 = vpop.permute.xlu0 %987
        %v989 = vlaneseq
        %v990 = vshrl.u32 %v989, 7
        %v991 = vsub.s32 %v423, %v990
        %v992 = vrot.slane %v988, %v991
        %v993 = vsel %vm471, %v992, 0
        %995 = vmatprep.subr.mxu0 0.0
        %996 = vmatpush1.msra.mxu0 0.0
        %997 = vmatprep.subr.mxu0 0.0
        %998 = vmatpush1.msra.mxu0 0.0
        %999 = vmatprep.subr.mxu0 0.0
        %1000 = vmatpush1.msra.mxu0 0.0
        %1001 = vmatprep.subr.mxu0 0.0
        %1002 = vmatpush1.msra.mxu0 0.0
        %1003 = vmatprep.subr.mxu0 0.0
        %1004 = vmatpush1.msra.mxu0 0.0
        %1005 = vmatprep.subr.mxu0 0.0
        %1006 = vmatpush1.msra.mxu0 0.0
        %1007 = vmatprep.subr.mxu0 0.0
        %1008 = vmatpush1.msra.mxu0 0.0
        %1009 = vmatprep.subr.mxu0 0.0
        %1010 = vmatpush1.msra.mxu0 0.0
        %1011 = vmatprep.subr.mxu0 0.0
        %1012 = vmatpush1.msra.mxu0 0.0
        %1013 = vmatprep.subr.mxu0 0.0
        %1014 = vmatpush1.msra.mxu0 0.0
        %1015 = vmatprep.subr.mxu0 0.0
        %1016 = vmatpush1.msra.mxu0 0.0
        %1017 = vmatprep.subr.mxu0 0.0
        %1018 = vmatpush1.msra.mxu0 0.0
        %1019 = vmatprep.subr.mxu0 0.0
        %1020 = vmatpush1.msra.mxu0 0.0
        %1021 = vmatprep.subr.mxu0 0.0
        %1022 = vmatpush1.msra.mxu0 0.0
        %1023 = vmatprep.subr.mxu0 0.0
        %1024 = vmatpush1.msra.mxu0 0.0
        %1025 = vmatprep.subr.mxu0 0.0
        %1026 = vmatpush1.msra.mxu0 %v221
        %1027 = vmatprep.subr.mxu0 0.0
        %1028 = vmatpush2.msra.mxu0 0.0
        %1029 = vmatprep.subr.mxu0 0.0
        %1030 = vmatpush2.msra.mxu0 0.0
        %1031 = vmatprep.subr.mxu0 0.0
        %1032 = vmatpush2.msra.mxu0 0.0
        %1033 = vmatprep.subr.mxu0 0.0
        %1034 = vmatpush2.msra.mxu0 0.0
        %1035 = vmatprep.subr.mxu0 0.0
        %1036 = vmatpush2.msra.mxu0 0.0
        %1037 = vmatprep.subr.mxu0 0.0
        %1038 = vmatpush2.msra.mxu0 0.0
        %1039 = vmatprep.subr.mxu0 0.0
        %1040 = vmatpush2.msra.mxu0 0.0
        %1041 = vmatprep.subr.mxu0 0.0
        %1042 = vmatpush2.msra.mxu0 0.0
        %1043 = vmatprep.subr.mxu0 0.0
        %1044 = vmatpush2.msra.mxu0 0.0
        %1045 = vmatprep.subr.mxu0 0.0
        %1046 = vmatpush2.msra.mxu0 0.0
        %1047 = vmatprep.subr.mxu0 0.0
        %1048 = vmatpush2.msra.mxu0 0.0
        %1049 = vmatprep.subr.mxu0 0.0
        %1050 = vmatpush2.msra.mxu0 0.0
        %1051 = vmatprep.subr.mxu0 0.0
        %1052 = vmatpush2.msra.mxu0 0.0
        %1053 = vmatprep.subr.mxu0 0.0
        %1054 = vmatpush2.msra.mxu0 0.0
        %1055 = vmatprep.subr.mxu0 0.0
        %1056 = vmatpush2.msra.mxu0 0.0
        %1057 = vmatprep.subr.mxu0 0.0
        %1058 = vmatpush2.msra.mxu0 0.0
        %1059 = vmatprep.mubr.f32.mxu0 0.0
        %1060 = vmatmul.mubr.f32.gmra.mxu0 %v993
        %v1061 = vpop.f32.mrf.mxu0
        %v1062 = vadd.f32 0.0, %v1061
        %v1063 = vpop.f32.mrf.mxu0
        %1064 = vdwg.mxu0
        %1066 = vset.pattern.permute.xlu0 0
        %1067 = vperm.xlu0 %1066, %v662
        %v1068 = vpop.permute.xlu0 %1067
        %v1069 = vlaneseq
        %v1070 = vshrl.u32 %v1069, 7
        %v1071 = vsub.s32 %v423, %v1070
        %v1072 = vrot.slane %v1068, %v1071
        %v1073 = vsel %vm471, %v1072, 0
        %1075 = vmatprep.subr.mxu0 0.0
        %1076 = vmatpush1.msra.mxu0 0.0
        %1077 = vmatprep.subr.mxu0 0.0
        %1078 = vmatpush1.msra.mxu0 0.0
        %1079 = vmatprep.subr.mxu0 0.0
        %1080 = vmatpush1.msra.mxu0 0.0
        %1081 = vmatprep.subr.mxu0 0.0
        %1082 = vmatpush1.msra.mxu0 0.0
        %1083 = vmatprep.subr.mxu0 0.0
        %1084 = vmatpush1.msra.mxu0 0.0
        %1085 = vmatprep.subr.mxu0 0.0
        %1086 = vmatpush1.msra.mxu0 0.0
        %1087 = vmatprep.subr.mxu0 0.0
        %1088 = vmatpush1.msra.mxu0 0.0
        %1089 = vmatprep.subr.mxu0 0.0
        %1090 = vmatpush1.msra.mxu0 0.0
        %1091 = vmatprep.subr.mxu0 0.0
        %1092 = vmatpush1.msra.mxu0 0.0
        %1093 = vmatprep.subr.mxu0 0.0
        %1094 = vmatpush1.msra.mxu0 0.0
        %1095 = vmatprep.subr.mxu0 0.0
        %1096 = vmatpush1.msra.mxu0 0.0
        %1097 = vmatprep.subr.mxu0 0.0
        %1098 = vmatpush1.msra.mxu0 0.0
        %1099 = vmatprep.subr.mxu0 0.0
        %1100 = vmatpush1.msra.mxu0 0.0
        %1101 = vmatprep.subr.mxu0 0.0
        %1102 = vmatpush1.msra.mxu0 0.0
        %1103 = vmatprep.subr.mxu0 0.0
        %1104 = vmatpush1.msra.mxu0 0.0
        %1105 = vmatprep.subr.mxu0 0.0
        %1106 = vmatpush1.msra.mxu0 %v222
        %1107 = vmatprep.subr.mxu0 0.0
        %1108 = vmatpush2.msra.mxu0 0.0
        %1109 = vmatprep.subr.mxu0 0.0
        %1110 = vmatpush2.msra.mxu0 0.0
        %1111 = vmatprep.subr.mxu0 0.0
        %1112 = vmatpush2.msra.mxu0 0.0
        %1113 = vmatprep.subr.mxu0 0.0
        %1114 = vmatpush2.msra.mxu0 0.0
        %1115 = vmatprep.subr.mxu0 0.0
        %1116 = vmatpush2.msra.mxu0 0.0
        %1117 = vmatprep.subr.mxu0 0.0
        %1118 = vmatpush2.msra.mxu0 0.0
        %1119 = vmatprep.subr.mxu0 0.0
        %1120 = vmatpush2.msra.mxu0 0.0
        %1121 = vmatprep.subr.mxu0 0.0
        %1122 = vmatpush2.msra.mxu0 0.0
        %1123 = vmatprep.subr.mxu0 0.0
        %1124 = vmatpush2.msra.mxu0 0.0
        %1125 = vmatprep.subr.mxu0 0.0
        %1126 = vmatpush2.msra.mxu0 0.0
        %1127 = vmatprep.subr.mxu0 0.0
        %1128 = vmatpush2.msra.mxu0 0.0
        %1129 = vmatprep.subr.mxu0 0.0
        %1130 = vmatpush2.msra.mxu0 0.0
        %1131 = vmatprep.subr.mxu0 0.0
        %1132 = vmatpush2.msra.mxu0 0.0
        %1133 = vmatprep.subr.mxu0 0.0
        %1134 = vmatpush2.msra.mxu0 0.0
        %1135 = vmatprep.subr.mxu0 0.0
        %1136 = vmatpush2.msra.mxu0 0.0
        %1137 = vmatprep.subr.mxu0 0.0
        %1138 = vmatpush2.msra.mxu0 0.0
        %1139 = vmatprep.mubr.f32.mxu0 0.0
        %1140 = vmatmul.mubr.f32.gmra.mxu0 %v1073
        %v1141 = vpop.f32.mrf.mxu0
        %v1142 = vadd.f32 0.0, %v1141
        %v1143 = vpop.f32.mrf.mxu0
        %1144 = vdwg.mxu0
        %1146 = vset.pattern.permute.xlu0 0
        %1147 = vperm.xlu0 %1146, %v663
        %v1148 = vpop.permute.xlu0 %1147
        %v1149 = vlaneseq
        %v1150 = vshrl.u32 %v1149, 7
        %v1151 = vsub.s32 %v423, %v1150
        %v1152 = vrot.slane %v1148, %v1151
        %v1153 = vsel %vm471, %v1152, 0
        %1155 = vmatprep.subr.mxu0 0.0
        %1156 = vmatpush1.msra.mxu0 0.0
        %1157 = vmatprep.subr.mxu0 0.0
        %1158 = vmatpush1.msra.mxu0 0.0
        %1159 = vmatprep.subr.mxu0 0.0
        %1160 = vmatpush1.msra.mxu0 0.0
        %1161 = vmatprep.subr.mxu0 0.0
        %1162 = vmatpush1.msra.mxu0 0.0
        %1163 = vmatprep.subr.mxu0 0.0
        %1164 = vmatpush1.msra.mxu0 0.0
        %1165 = vmatprep.subr.mxu0 0.0
        %1166 = vmatpush1.msra.mxu0 0.0
        %1167 = vmatprep.subr.mxu0 0.0
        %1168 = vmatpush1.msra.mxu0 0.0
        %1169 = vmatprep.subr.mxu0 0.0
        %1170 = vmatpush1.msra.mxu0 0.0
        %1171 = vmatprep.subr.mxu0 0.0
        %1172 = vmatpush1.msra.mxu0 0.0
        %1173 = vmatprep.subr.mxu0 0.0
        %1174 = vmatpush1.msra.mxu0 0.0
        %1175 = vmatprep.subr.mxu0 0.0
        %1176 = vmatpush1.msra.mxu0 0.0
        %1177 = vmatprep.subr.mxu0 0.0
        %1178 = vmatpush1.msra.mxu0 0.0
        %1179 = vmatprep.subr.mxu0 0.0
        %1180 = vmatpush1.msra.mxu0 0.0
        %1181 = vmatprep.subr.mxu0 0.0
        %1182 = vmatpush1.msra.mxu0 0.0
        %1183 = vmatprep.subr.mxu0 0.0
        %1184 = vmatpush1.msra.mxu0 0.0
        %1185 = vmatprep.subr.mxu0 0.0
        %1186 = vmatpush1.msra.mxu0 %v223
        %1187 = vmatprep.subr.mxu0 0.0
        %1188 = vmatpush2.msra.mxu0 0.0
        %1189 = vmatprep.subr.mxu0 0.0
        %1190 = vmatpush2.msra.mxu0 0.0
        %1191 = vmatprep.subr.mxu0 0.0
        %1192 = vmatpush2.msra.mxu0 0.0
        %1193 = vmatprep.subr.mxu0 0.0
        %1194 = vmatpush2.msra.mxu0 0.0
        %1195 = vmatprep.subr.mxu0 0.0
        %1196 = vmatpush2.msra.mxu0 0.0
        %1197 = vmatprep.subr.mxu0 0.0
        %1198 = vmatpush2.msra.mxu0 0.0
        %1199 = vmatprep.subr.mxu0 0.0
        %1200 = vmatpush2.msra.mxu0 0.0
        %1201 = vmatprep.subr.mxu0 0.0
        %1202 = vmatpush2.msra.mxu0 0.0
        %1203 = vmatprep.subr.mxu0 0.0
        %1204 = vmatpush2.msra.mxu0 0.0
        %1205 = vmatprep.subr.mxu0 0.0
        %1206 = vmatpush2.msra.mxu0 0.0
        %1207 = vmatprep.subr.mxu0 0.0
        %1208 = vmatpush2.msra.mxu0 0.0
        %1209 = vmatprep.subr.mxu0 0.0
        %1210 = vmatpush2.msra.mxu0 0.0
        %1211 = vmatprep.subr.mxu0 0.0
        %1212 = vmatpush2.msra.mxu0 0.0
        %1213 = vmatprep.subr.mxu0 0.0
        %1214 = vmatpush2.msra.mxu0 0.0
        %1215 = vmatprep.subr.mxu0 0.0
        %1216 = vmatpush2.msra.mxu0 0.0
        %1217 = vmatprep.subr.mxu0 0.0
        %1218 = vmatpush2.msra.mxu0 0.0
        %1219 = vmatprep.mubr.f32.mxu0 0.0
        %1220 = vmatmul.mubr.f32.gmra.mxu0 %v1153
        %v1221 = vpop.f32.mrf.mxu0
        %v1222 = vadd.f32 0.0, %v1221
        %v1223 = vpop.f32.mrf.mxu0
        %1224 = vdwg.mxu0
        %1226 = vset.pattern.permute.xlu0 0
        %1227 = vperm.xlu0 %1226, %v664
        %v1228 = vpop.permute.xlu0 %1227
        %v1229 = vlaneseq
        %v1230 = vshrl.u32 %v1229, 7
        %v1231 = vsub.s32 %v423, %v1230
        %v1232 = vrot.slane %v1228, %v1231
        %v1233 = vsel %vm471, %v1232, 0
        %1235 = vmatprep.subr.mxu0 0.0
        %1236 = vmatpush1.msra.mxu0 0.0
        %1237 = vmatprep.subr.mxu0 0.0
        %1238 = vmatpush1.msra.mxu0 0.0
        %1239 = vmatprep.subr.mxu0 0.0
        %1240 = vmatpush1.msra.mxu0 0.0
        %1241 = vmatprep.subr.mxu0 0.0
        %1242 = vmatpush1.msra.mxu0 0.0
        %1243 = vmatprep.subr.mxu0 0.0
        %1244 = vmatpush1.msra.mxu0 0.0
        %1245 = vmatprep.subr.mxu0 0.0
        %1246 = vmatpush1.msra.mxu0 0.0
        %1247 = vmatprep.subr.mxu0 0.0
        %1248 = vmatpush1.msra.mxu0 0.0
        %1249 = vmatprep.subr.mxu0 0.0
        %1250 = vmatpush1.msra.mxu0 0.0
        %1251 = vmatprep.subr.mxu0 0.0
        %1252 = vmatpush1.msra.mxu0 0.0
        %1253 = vmatprep.subr.mxu0 0.0
        %1254 = vmatpush1.msra.mxu0 0.0
        %1255 = vmatprep.subr.mxu0 0.0
        %1256 = vmatpush1.msra.mxu0 0.0
        %1257 = vmatprep.subr.mxu0 0.0
        %1258 = vmatpush1.msra.mxu0 0.0
        %1259 = vmatprep.subr.mxu0 0.0
        %1260 = vmatpush1.msra.mxu0 0.0
        %1261 = vmatprep.subr.mxu0 0.0
        %1262 = vmatpush1.msra.mxu0 0.0
        %1263 = vmatprep.subr.mxu0 0.0
        %1264 = vmatpush1.msra.mxu0 0.0
        %1265 = vmatprep.subr.mxu0 0.0
        %1266 = vmatpush1.msra.mxu0 %v224
        %1267 = vmatprep.subr.mxu0 0.0
        %1268 = vmatpush2.msra.mxu0 0.0
        %1269 = vmatprep.subr.mxu0 0.0
        %1270 = vmatpush2.msra.mxu0 0.0
        %1271 = vmatprep.subr.mxu0 0.0
        %1272 = vmatpush2.msra.mxu0 0.0
        %1273 = vmatprep.subr.mxu0 0.0
        %1274 = vmatpush2.msra.mxu0 0.0
        %1275 = vmatprep.subr.mxu0 0.0
        %1276 = vmatpush2.msra.mxu0 0.0
        %1277 = vmatprep.subr.mxu0 0.0
        %1278 = vmatpush2.msra.mxu0 0.0
        %1279 = vmatprep.subr.mxu0 0.0
        %1280 = vmatpush2.msra.mxu0 0.0
        %1281 = vmatprep.subr.mxu0 0.0
        %1282 = vmatpush2.msra.mxu0 0.0
        %1283 = vmatprep.subr.mxu0 0.0
        %1284 = vmatpush2.msra.mxu0 0.0
        %1285 = vmatprep.subr.mxu0 0.0
        %1286 = vmatpush2.msra.mxu0 0.0
        %1287 = vmatprep.subr.mxu0 0.0
        %1288 = vmatpush2.msra.mxu0 0.0
        %1289 = vmatprep.subr.mxu0 0.0
        %1290 = vmatpush2.msra.mxu0 0.0
        %1291 = vmatprep.subr.mxu0 0.0
        %1292 = vmatpush2.msra.mxu0 0.0
        %1293 = vmatprep.subr.mxu0 0.0
        %1294 = vmatpush2.msra.mxu0 0.0
        %1295 = vmatprep.subr.mxu0 0.0
        %1296 = vmatpush2.msra.mxu0 0.0
        %1297 = vmatprep.subr.mxu0 0.0
        %1298 = vmatpush2.msra.mxu0 0.0
        %1299 = vmatprep.mubr.f32.mxu0 0.0
        %1300 = vmatmul.mubr.f32.gmra.mxu0 %v1233
        %v1301 = vpop.f32.mrf.mxu0
        %v1302 = vadd.f32 0.0, %v1301
        %v1303 = vpop.f32.mrf.mxu0
        %1304 = vdwg.mxu0
        %v1313 = vrot.slane %v822, 7
        %v1314 = vsel %vm456, %v1313, %v742
        %v1315 = vrot.slane %v902, 6
        %v1316 = vsel %vm458, %v1315, %v1314
        %v1317 = vrot.slane %v982, 5
        %v1318 = vsel %vm460, %v1317, %v1316
        %v1319 = vrot.slane %v1062, 4
        %v1320 = vsel %vm462, %v1319, %v1318
        %v1321 = vrot.slane %v1142, 3
        %v1322 = vsel %vm464, %v1321, %v1320
        %v1323 = vrot.slane %v1222, 2
        %v1324 = vsel %vm466, %v1323, %v1322
        %v1325 = vrot.slane %v1302, 1
        %v1326 = vsel %vm468, %v1325, %v1324
        %1328 = vst.msk [vmem:[%s215] sm:$0xff] %vm236, %v1326
        %s1329 = sand.u32 %s118, 1
        %s1330 = scalar_lea.sflag [#allocation4], %s1329
        %s1331 = sand.u32 %s118, 1
        %s1332 = smul.addr %s1331, 8
        %s1333 = scalar_lea.vmem [#allocation5], %s1332
        // Predicated region
        $region41: #{tpu_custom_call.1} parent=35 // pred_check
          %p1334 = pneg %p128
        $region42: #{tpu_custom_call.1} parent=35 // pred_check_branch
          %1336 = sbr.rel (%p1334) target = $region44
        $region43: #{tpu_custom_call.1} parent=35 // pred_region
          %s1338 = ssub.s32 128, 128
          %1339 = vsyncadd %s1330, %s1338
          %s1340 = smul.addr %s21, 128
          %s1341 = scalar_lea.hbm %s4, %s1340
          %s1343 = sshll.u32 %s1333, 4
          %s1344 = int_to_ptr.vmem [resolvable:$true] %s1343
          %1346 = dma.vmem_to_hbm [thread:$0]  %s1344, 128, %s1341, %s1330
        $region44: #{tpu_custom_call.1} parent=35 // pred_fallthru
          _
      $region36: #{tpu_custom_call.1} parent=5 // pred_fallthru
        _
      %p1347 = scmp.le.s32.totalorder 2, %s16
      // Predicated region
      $region45: #{tpu_custom_call.1} parent=5 // pred_check
        %p1348 = pneg %p1347
      $region46: #{tpu_custom_call.1} parent=5 // pred_check_branch
        %1350 = sbr.rel (%p1348) target = $region48
      $region47: #{tpu_custom_call.1} parent=5 // pred_region
        %s1351 = ssub.s32 %s16, 2
        // Predicated region
        $region49: #{tpu_custom_call.1} parent=47 // pred_check
          %p1352 = pneg %p134
        $region50: #{tpu_custom_call.1} parent=47 // pred_check_branch
          %1354 = sbr.rel (%p1352) target = $region52
        $region51: #{tpu_custom_call.1} parent=47 // pred_region
          %s1355 = sand.u32 %s119, 1
          %s1356 = scalar_lea.sflag [#allocation4], %s1355
          %s1357 = sand.u32 %s119, 1
          %s1358 = smul.addr %s1357, 8
          %s1359 = scalar_lea.vmem [#allocation5], %s1358
          %1360 = dma.done %s1356, 128
        $region52: #{tpu_custom_call.1} parent=47 // pred_fallthru
          _
      $region48: #{tpu_custom_call.1} parent=5 // pred_fallthru
        _
    $region6: #{tpu_custom_call.1} parent=1 // loop_footer
      %s20 = sadd.s32 1, %s16
    $region7: #{tpu_custom_call.1} parent=1 // loop_footer_branch
      %15 = sbr.rel target = $region3
    $region8: #{tpu_custom_call.1} parent=1 // loop_exit
      _
    %1361 = vsyncpa [#allocation3], 1
    %s1362 = scalar_lea.sflag [#allocation3], 1
    %1363 = vsyncpa %s1362, 1
    %1364 = vsyncpa [#allocation4], 1
    %s1365 = scalar_lea.sflag [#allocation4], 1
    %1366 = vsyncpa %s1365, 1

</llo_original>
